<compile_context>
chip_gen: v6e
topology: v6e:2x2x1
jax: 0.10.0
libtpu: 0.0.40
codegen_flags: <defaults>
</compile_context>

<pallas_src>
import functools

import jax
import jax.numpy as jnp
from jax import lax
from jax.experimental import pallas as pl
from jax.experimental.pallas import tpu as pltpu

DEGREE = 10        # poly output size
NUM_FEATURES = 60  # RNN input size
HIDDEN = 30        # RNN hidden size per direction (bidirectional -> 60 output feats)


def poly_rnn_kernel(x_ref, wih_ref, bih_ref, whh_ref, wpoly_ref, bpoly_ref,
                    wfc_ref, bfc_ref, out_ref, xproj_ref, hcat_ref, *,
                    seq_len, batch):
    """x_ref: (S*B, 60) flattened time-major input (B already padded to a multiple of 8).

    wih_ref  : (60, 60)  [wih_fwd | wih_bwd]          (pre-transposed)
    bih_ref  : (1, 60)   [b_fwd   | b_bwd]            (b_ih + b_hh per direction)
    whh_ref  : (60, 60)  block-diag(whh_fwd, whh_bwd) (pre-transposed)
    wpoly_ref: (60, 10)  [wpoly_fwd ; wpoly_bwd]      (pre-transposed)
    bpoly_ref: (1, 10)   wfc_ref: (1, 10) (fc weight as a row)   bfc_ref: (1, 1)
    out_ref  : (1, S*B)  lane-dense output
    xproj_ref, hcat_ref: (S*B, 60) f32 VMEM scratches
    """
    # ---- prologue: hoisted input projection, biases folded in (one big MXU matmul) ----
    xproj_ref[...] = (
        jnp.dot(x_ref[...], wih_ref[...], preferred_element_type=jnp.float32)
        + bih_ref[...])

    whh = whh_ref[...]                                              # (60, 60) block-diag
    # lanes < HIDDEN take the forward-time rows, lanes >= HIDDEN the backward-time rows.
    lane = lax.broadcasted_iota(jnp.int32, (batch, 2 * HIDDEN), 1)  # hoisted out of loop
    fwd_mask = lane < HIDDEN

    # ---- fused bidirectional recurrence: one (B,60)x(60,60) dot + tanh per step ----
    def step(i, h):
        row_f = pl.multiple_of(i * batch, 8)                  # rows of time i
        row_b = pl.multiple_of((seq_len - 1 - i) * batch, 8)  # rows of time S-1-i
        xf = xproj_ref[pl.ds(row_f, batch), :]                # fwd proj valid in lanes 0:30
        xb = xproj_ref[pl.ds(row_b, batch), :]                # bwd proj valid in lanes 30:60
        x_cat = jnp.where(fwd_mask, xf, xb)                   # (B, 60)
        h = jnp.tanh(x_cat +
                     jnp.dot(h, whh, preferred_element_type=jnp.float32))
        hcat_ref[pl.ds(row_f, batch), 0:HIDDEN] = h[:, 0:HIDDEN]
        hcat_ref[pl.ds(row_b, batch), HIDDEN:2 * HIDDEN] = h[:, HIDDEN:2 * HIDDEN]
        return h

    h0 = jnp.zeros((batch, 2 * HIDDEN), jnp.float32)
    lax.fori_loop(0, seq_len, step, h0, unroll=True)

    # ---- batched epilogue: poly -> ReLU -> fc -> ReLU, single lane-dense store ----
    p = jnp.maximum(
        jnp.dot(hcat_ref[...], wpoly_ref[...], preferred_element_type=jnp.float32)
        + bpoly_ref[...], 0.0)                                      # (S*B, 10)
    o = jnp.dot(wfc_ref[...], p.T, preferred_element_type=jnp.float32) + bfc_ref[...]
    out_ref[...] = jnp.maximum(o, 0.0)                              # (1, S*B)


def polynomial_regression_forward(x, params):
    S, B, F = x.shape
    assert F == NUM_FEATURES
    # Pad batch to a sublane multiple so every per-step row block is 8-aligned.
    B_pad = max(8, ((B + 7) // 8) * 8)
    xp = x.astype(jnp.float32)
    if B_pad != B:
        xp = jnp.pad(xp, ((0, 0), (0, B_pad - B), (0, 0)))
    x2d = xp.reshape(S * B_pad, F)

    # Wrapper-side weight packing (pure XLA, outside the kernel).
    wih_cat = jnp.concatenate([params["wih_f"], params["wih_b"]], axis=1)      # (60, 60)
    b_cat = jnp.concatenate([params["b_f"], params["b_b"]], axis=1)            # (1, 60)
    zeros_h = jnp.zeros((HIDDEN, HIDDEN), jnp.float32)
    whh_bd = jnp.block([[params["whh_f"], zeros_h],
                        [zeros_h, params["whh_b"]]])                           # (60, 60)
    wpoly_cat = jnp.concatenate([params["wpoly_f"], params["wpoly_b"]], 0)     # (60, 10)
    wfc_row = params["wfc"].T                                                  # (1, 10)

    vmem = pl.BlockSpec(memory_space=pltpu.MemorySpace.VMEM)
    args = (x2d, wih_cat, b_cat, whh_bd, wpoly_cat,
            params["b_poly"], wfc_row, params["b_fc"])
    # NOTE: whole-array VMEM residency is fine at these sizes; for large S*B, add a
    # parallel grid axis over batch (BlockSpec blocking B) so v7x's second TensorCore
    # is used and the working set stays under v7x's 64 MiB VMEM.
    out_flat = pl.pallas_call(
        functools.partial(poly_rnn_kernel, seq_len=S, batch=B_pad),
        out_shape=jax.ShapeDtypeStruct((1, S * B_pad), jnp.float32),
        in_specs=[vmem] * len(args),
        out_specs=vmem,
        scratch_shapes=[pltpu.VMEM((S * B_pad, 2 * HIDDEN), jnp.float32),   # x @ Wih
                        pltpu.VMEM((S * B_pad, 2 * HIDDEN), jnp.float32)],  # RNN hidden
    )(*args)
    out = out_flat.reshape(S, B_pad)[:, :B]
    return out[:, :, None]


def init_params(key):
    """Deterministic PyTorch-style uniform init (weights stored pre-transposed)."""
    ks = jax.random.split(key, 13)

    def unif(k, shape, fan):
        bound = 1.0 / float(jnp.sqrt(jnp.float32(fan)))
        return jax.random.uniform(k, shape, jnp.float32, -bound, bound)

    # nn.RNN(60, 30, bidirectional=True): all params ~ U(-1/sqrt(H), 1/sqrt(H))
    wih_f = unif(ks[0], (NUM_FEATURES, HIDDEN), HIDDEN)
    whh_f = unif(ks[1], (HIDDEN, HIDDEN), HIDDEN)
    b_f = unif(ks[2], (1, HIDDEN), HIDDEN) + unif(ks[3], (1, HIDDEN), HIDDEN)  # b_ih + b_hh
    wih_b = unif(ks[4], (NUM_FEATURES, HIDDEN), HIDDEN)
    whh_b = unif(ks[5], (HIDDEN, HIDDEN), HIDDEN)
    b_b = unif(ks[6], (1, HIDDEN), HIDDEN) + unif(ks[7], (1, HIDDEN), HIDDEN)
    # poly: Linear(60, 10); its (10, 60) weight split into fwd/bwd halves, transposed.
    wpoly_f = unif(ks[8], (HIDDEN, DEGREE), 2 * HIDDEN)
    wpoly_b = unif(ks[9], (HIDDEN, DEGREE), 2 * HIDDEN)
    b_poly = unif(ks[10], (1, DEGREE), 2 * HIDDEN)
    # fc: Linear(10, 1)
    wfc = unif(ks[11], (DEGREE, 1), DEGREE)
    b_fc = unif(ks[12], (1, 1), DEGREE)
    return dict(wih_f=wih_f, whh_f=whh_f, b_f=b_f,
                wih_b=wih_b, whh_b=whh_b, b_b=b_b,
                wpoly_f=wpoly_f, wpoly_b=wpoly_b, b_poly=b_poly,
                wfc=wfc, b_fc=b_fc)


def reference_forward(x, params):
    """Pure-JAX reference reproducing the PyTorch forward semantics."""
    S, B, _ = x.shape

    def run_dir(wih, whh, b, xs):
        def step(h, x_t):
            h = jnp.tanh(x_t @ wih + h @ whh + b)
            return h, h
        h0 = jnp.zeros((B, HIDDEN), jnp.float32)
        _, hs = lax.scan(step, h0, xs)
        return hs

    hf = run_dir(params["wih_f"], params["whh_f"], params["b_f"], x)
    hb = run_dir(params["wih_b"], params["whh_b"], params["b_b"], x[::-1])[::-1]
    p = jnp.maximum(hf @ params["wpoly_f"] + hb @ params["wpoly_b"] + params["b_poly"], 0.0)
    o = jnp.maximum(p @ params["wfc"] + params["b_fc"], 0.0)
    return o


if __name__ == "__main__":
    key = jax.random.PRNGKey(0)
    kx, kp = jax.random.split(key)
    # x: (batch_size=4, time_steps=8, num_features=60) as in the script; the RNN
    # (batch_first=False) treats dim0 as seq and dim1 as batch — we reproduce that.
    x = jax.random.normal(kx, (4, 8, NUM_FEATURES), jnp.float32)
    params = init_params(kp)

    out = jax.block_until_ready(polynomial_regression_forward(x, params))
    ref = reference_forward(x, params)
    assert out.shape == (4, 8, 1)
    assert jnp.allclose(out, ref, atol=3e-5, rtol=3e-5), "mismatch vs pure-JAX reference"
    print("KERNEL_OK")
</pallas_src>

<mosaic_0001>
module attributes {stable_mosaic.version = 11 : i64} {
  func.func @poly_rnn_kernel(%arg0: memref<32x60xf32, #tpu.memory_space<vmem>>, %arg1: memref<60x60xf32, #tpu.memory_space<vmem>>, %arg2: memref<1x60xf32, #tpu.memory_space<vmem>>, %arg3: memref<60x60xf32, #tpu.memory_space<vmem>>, %arg4: memref<60x10xf32, #tpu.memory_space<vmem>>, %arg5: memref<1x10xf32, #tpu.memory_space<vmem>>, %arg6: memref<1x10xf32, #tpu.memory_space<vmem>>, %arg7: memref<1x1xf32, #tpu.memory_space<vmem>>, %arg8: memref<1x32xf32, #tpu.memory_space<vmem>>, %arg9: memref<32x60xf32, #tpu.memory_space<vmem>>, %arg10: memref<32x60xf32, #tpu.memory_space<vmem>>) attributes {dimension_semantics = [], scalar_prefetch = 0 : i64, scratch_operands = 2 : i64, tpu.core_type = #tpu.core_type<tc>} {
    %c0 = arith.constant 0 : index
    %c0_0 = arith.constant 0 : index
    %0 = vector.load %arg0[%c0, %c0_0] : memref<32x60xf32, #tpu.memory_space<vmem>>, vector<32x60xf32>
    %c0_1 = arith.constant 0 : index
    %c0_2 = arith.constant 0 : index
    %1 = vector.load %arg1[%c0_1, %c0_2] : memref<60x60xf32, #tpu.memory_space<vmem>>, vector<60x60xf32>
    %cst = arith.constant dense<0.000000e+00> : vector<32x60xf32>
    %2 = tpu.matmul %0, %1, %cst {dimension_numbers = #tpu.dot_dimension_numbers<[1], [0], [0], [1], [0, 0, 1, 1], [], []>} : vector<32x60xf32>, vector<60x60xf32>, vector<32x60xf32> -> vector<32x60xf32>
    %c0_3 = arith.constant 0 : index
    %c0_4 = arith.constant 0 : index
    %3 = vector.load %arg2[%c0_3, %c0_4] : memref<1x60xf32, #tpu.memory_space<vmem>>, vector<1x60xf32>
    %4 = vector.broadcast %3 : vector<1x60xf32> to vector<32x60xf32>
    %5 = arith.addf %2, %4 : vector<32x60xf32>
    %c0_5 = arith.constant 0 : index
    %c0_6 = arith.constant 0 : index
    %6 = vector.load %arg9[%c0_5, %c0_6] : memref<32x60xf32, #tpu.memory_space<vmem>>, vector<32x60xf32>
    tpu.vector_store %arg9[%c0_5, %c0_6], %5 {strides = array<i32>} : memref<32x60xf32, #tpu.memory_space<vmem>>, vector<32x60xf32>,
    %c0_7 = arith.constant 0 : index
    %c0_8 = arith.constant 0 : index
    %7 = vector.load %arg3[%c0_7, %c0_8] : memref<60x60xf32, #tpu.memory_space<vmem>>, vector<60x60xf32>
    %8 = tpu.iota {dimensions = array<i32: 1>} : vector<8x60xi32>
    %c30_i32 = arith.constant 30 : i32
    %9 = vector.broadcast %c30_i32 : i32 to vector<8x60xi32>
    %10 = arith.cmpi slt, %8, %9 : vector<8x60xi32>
    %cst_9 = arith.constant 0.000000e+00 : f32
    %11 = vector.broadcast %cst_9 : f32 to vector<8x60xf32>
    %c0_i32 = arith.constant 0 : i32
    %c8_i32 = arith.constant 8 : i32
    %12 = arith.muli %c0_i32, %c8_i32 : i32
    %13 = tpu.assume_multiple %12, 8 : i32
    %c3_i32 = arith.constant 3 : i32
    %14 = arith.subi %c3_i32, %c0_i32 : i32
    %c8_i32_10 = arith.constant 8 : i32
    %15 = arith.muli %14, %c8_i32_10 : i32
    %16 = tpu.assume_multiple %15, 8 : i32
    %17 = arith.index_cast %13 : i32 to index
    %c0_11 = arith.constant 0 : index
    %18 = vector.load %arg9[%17, %c0_11] : memref<32x60xf32, #tpu.memory_space<vmem>>, vector<8x60xf32>
    %19 = arith.index_cast %16 : i32 to index
    %c0_12 = arith.constant 0 : index
    %20 = vector.load %arg9[%19, %c0_12] : memref<32x60xf32, #tpu.memory_space<vmem>>, vector<8x60xf32>
    %21 = arith.select %10, %18, %20 : vector<8x60xi1>, vector<8x60xf32>
    %cst_13 = arith.constant dense<0.000000e+00> : vector<8x60xf32>
    %22 = tpu.matmul %11, %7, %cst_13 {dimension_numbers = #tpu.dot_dimension_numbers<[1], [0], [0], [1], [0, 0, 1, 1], [], []>} : vector<8x60xf32>, vector<60x60xf32>, vector<8x60xf32> -> vector<8x60xf32>
    %23 = arith.addf %21, %22 : vector<8x60xf32>
    %24 = math.tanh %23 : vector<8x60xf32>
    %25 = vector.extract_strided_slice %24 {offsets = [0, 0], sizes = [8, 30], strides = [1, 1]} : vector<8x60xf32> to vector<8x30xf32>
    %26 = arith.index_cast %13 : i32 to index
    %c0_14 = arith.constant 0 : index
    %27 = vector.load %arg10[%26, %c0_14] : memref<32x60xf32, #tpu.memory_space<vmem>>, vector<8x30xf32>
    tpu.vector_store %arg10[%26, %c0_14], %25 {strides = array<i32>} : memref<32x60xf32, #tpu.memory_space<vmem>>, vector<8x30xf32>,
    %28 = vector.extract_strided_slice %24 {offsets = [0, 30], sizes = [8, 30], strides = [1, 1]} : vector<8x60xf32> to vector<8x30xf32>
    %29 = arith.index_cast %16 : i32 to index
    %c30 = arith.constant 30 : index
    %30 = vector.load %arg10[%29, %c30] : memref<32x60xf32, #tpu.memory_space<vmem>>, vector<8x30xf32>
    tpu.vector_store %arg10[%29, %c30], %28 {strides = array<i32>} : memref<32x60xf32, #tpu.memory_space<vmem>>, vector<8x30xf32>,
    %c1_i32 = arith.constant 1 : i32
    %c8_i32_15 = arith.constant 8 : i32
    %31 = arith.muli %c1_i32, %c8_i32_15 : i32
    %32 = tpu.assume_multiple %31, 8 : i32
    %c3_i32_16 = arith.constant 3 : i32
    %33 = arith.subi %c3_i32_16, %c1_i32 : i32
    %c8_i32_17 = arith.constant 8 : i32
    %34 = arith.muli %33, %c8_i32_17 : i32
    %35 = tpu.assume_multiple %34, 8 : i32
    %36 = arith.index_cast %32 : i32 to index
    %c0_18 = arith.constant 0 : index
    %37 = vector.load %arg9[%36, %c0_18] : memref<32x60xf32, #tpu.memory_space<vmem>>, vector<8x60xf32>
    %38 = arith.index_cast %35 : i32 to index
    %c0_19 = arith.constant 0 : index
    %39 = vector.load %arg9[%38, %c0_19] : memref<32x60xf32, #tpu.memory_space<vmem>>, vector<8x60xf32>
    %40 = arith.select %10, %37, %39 : vector<8x60xi1>, vector<8x60xf32>
    %cst_20 = arith.constant dense<0.000000e+00> : vector<8x60xf32>
    %41 = tpu.matmul %24, %7, %cst_20 {dimension_numbers = #tpu.dot_dimension_numbers<[1], [0], [0], [1], [0, 0, 1, 1], [], []>} : vector<8x60xf32>, vector<60x60xf32>, vector<8x60xf32> -> vector<8x60xf32>
    %42 = arith.addf %40, %41 : vector<8x60xf32>
    %43 = math.tanh %42 : vector<8x60xf32>
    %44 = vector.extract_strided_slice %43 {offsets = [0, 0], sizes = [8, 30], strides = [1, 1]} : vector<8x60xf32> to vector<8x30xf32>
    %45 = arith.index_cast %32 : i32 to index
    %c0_21 = arith.constant 0 : index
    %46 = vector.load %arg10[%45, %c0_21] : memref<32x60xf32, #tpu.memory_space<vmem>>, vector<8x30xf32>
    tpu.vector_store %arg10[%45, %c0_21], %44 {strides = array<i32>} : memref<32x60xf32, #tpu.memory_space<vmem>>, vector<8x30xf32>,
    %47 = vector.extract_strided_slice %43 {offsets = [0, 30], sizes = [8, 30], strides = [1, 1]} : vector<8x60xf32> to vector<8x30xf32>
    %48 = arith.index_cast %35 : i32 to index
    %c30_22 = arith.constant 30 : index
    %49 = vector.load %arg10[%48, %c30_22] : memref<32x60xf32, #tpu.memory_space<vmem>>, vector<8x30xf32>
    tpu.vector_store %arg10[%48, %c30_22], %47 {strides = array<i32>} : memref<32x60xf32, #tpu.memory_space<vmem>>, vector<8x30xf32>,
    %c2_i32 = arith.constant 2 : i32
    %c8_i32_23 = arith.constant 8 : i32
    %50 = arith.muli %c2_i32, %c8_i32_23 : i32
    %51 = tpu.assume_multiple %50, 8 : i32
    %c3_i32_24 = arith.constant 3 : i32
    %52 = arith.subi %c3_i32_24, %c2_i32 : i32
    %c8_i32_25 = arith.constant 8 : i32
    %53 = arith.muli %52, %c8_i32_25 : i32
    %54 = tpu.assume_multiple %53, 8 : i32
    %55 = arith.index_cast %51 : i32 to index
    %c0_26 = arith.constant 0 : index
    %56 = vector.load %arg9[%55, %c0_26] : memref<32x60xf32, #tpu.memory_space<vmem>>, vector<8x60xf32>
    %57 = arith.index_cast %54 : i32 to index
    %c0_27 = arith.constant 0 : index
    %58 = vector.load %arg9[%57, %c0_27] : memref<32x60xf32, #tpu.memory_space<vmem>>, vector<8x60xf32>
    %59 = arith.select %10, %56, %58 : vector<8x60xi1>, vector<8x60xf32>
    %cst_28 = arith.constant dense<0.000000e+00> : vector<8x60xf32>
    %60 = tpu.matmul %43, %7, %cst_28 {dimension_numbers = #tpu.dot_dimension_numbers<[1], [0], [0], [1], [0, 0, 1, 1], [], []>} : vector<8x60xf32>, vector<60x60xf32>, vector<8x60xf32> -> vector<8x60xf32>
    %61 = arith.addf %59, %60 : vector<8x60xf32>
    %62 = math.tanh %61 : vector<8x60xf32>
    %63 = vector.extract_strided_slice %62 {offsets = [0, 0], sizes = [8, 30], strides = [1, 1]} : vector<8x60xf32> to vector<8x30xf32>
    %64 = arith.index_cast %51 : i32 to index
    %c0_29 = arith.constant 0 : index
    %65 = vector.load %arg10[%64, %c0_29] : memref<32x60xf32, #tpu.memory_space<vmem>>, vector<8x30xf32>
    tpu.vector_store %arg10[%64, %c0_29], %63 {strides = array<i32>} : memref<32x60xf32, #tpu.memory_space<vmem>>, vector<8x30xf32>,
    %66 = vector.extract_strided_slice %62 {offsets = [0, 30], sizes = [8, 30], strides = [1, 1]} : vector<8x60xf32> to vector<8x30xf32>
    %67 = arith.index_cast %54 : i32 to index
    %c30_30 = arith.constant 30 : index
    %68 = vector.load %arg10[%67, %c30_30] : memref<32x60xf32, #tpu.memory_space<vmem>>, vector<8x30xf32>
    tpu.vector_store %arg10[%67, %c30_30], %66 {strides = array<i32>} : memref<32x60xf32, #tpu.memory_space<vmem>>, vector<8x30xf32>,
    %c3_i32_31 = arith.constant 3 : i32
    %c8_i32_32 = arith.constant 8 : i32
    %69 = arith.muli %c3_i32_31, %c8_i32_32 : i32
    %70 = tpu.assume_multiple %69, 8 : i32
    %c3_i32_33 = arith.constant 3 : i32
    %71 = arith.subi %c3_i32_33, %c3_i32_31 : i32
    %c8_i32_34 = arith.constant 8 : i32
    %72 = arith.muli %71, %c8_i32_34 : i32
    %73 = tpu.assume_multiple %72, 8 : i32
    %74 = arith.index_cast %70 : i32 to index
    %c0_35 = arith.constant 0 : index
    %75 = vector.load %arg9[%74, %c0_35] : memref<32x60xf32, #tpu.memory_space<vmem>>, vector<8x60xf32>
    %76 = arith.index_cast %73 : i32 to index
    %c0_36 = arith.constant 0 : index
    %77 = vector.load %arg9[%76, %c0_36] : memref<32x60xf32, #tpu.memory_space<vmem>>, vector<8x60xf32>
    %78 = arith.select %10, %75, %77 : vector<8x60xi1>, vector<8x60xf32>
    %cst_37 = arith.constant dense<0.000000e+00> : vector<8x60xf32>
    %79 = tpu.matmul %62, %7, %cst_37 {dimension_numbers = #tpu.dot_dimension_numbers<[1], [0], [0], [1], [0, 0, 1, 1], [], []>} : vector<8x60xf32>, vector<60x60xf32>, vector<8x60xf32> -> vector<8x60xf32>
    %80 = arith.addf %78, %79 : vector<8x60xf32>
    %81 = math.tanh %80 : vector<8x60xf32>
    %82 = vector.extract_strided_slice %81 {offsets = [0, 0], sizes = [8, 30], strides = [1, 1]} : vector<8x60xf32> to vector<8x30xf32>
    %83 = arith.index_cast %70 : i32 to index
    %c0_38 = arith.constant 0 : index
    %84 = vector.load %arg10[%83, %c0_38] : memref<32x60xf32, #tpu.memory_space<vmem>>, vector<8x30xf32>
    tpu.vector_store %arg10[%83, %c0_38], %82 {strides = array<i32>} : memref<32x60xf32, #tpu.memory_space<vmem>>, vector<8x30xf32>,
    %85 = vector.extract_strided_slice %81 {offsets = [0, 30], sizes = [8, 30], strides = [1, 1]} : vector<8x60xf32> to vector<8x30xf32>
    %86 = arith.index_cast %73 : i32 to index
    %c30_39 = arith.constant 30 : index
    %87 = vector.load %arg10[%86, %c30_39] : memref<32x60xf32, #tpu.memory_space<vmem>>, vector<8x30xf32>
    tpu.vector_store %arg10[%86, %c30_39], %85 {strides = array<i32>} : memref<32x60xf32, #tpu.memory_space<vmem>>, vector<8x30xf32>,
    %c4_i32 = arith.constant 4 : i32
    %c0_40 = arith.constant 0 : index
    %c0_41 = arith.constant 0 : index
    %88 = vector.load %arg10[%c0_40, %c0_41] : memref<32x60xf32, #tpu.memory_space<vmem>>, vector<32x60xf32>
    %c0_42 = arith.constant 0 : index
    %c0_43 = arith.constant 0 : index
    %89 = vector.load %arg4[%c0_42, %c0_43] : memref<60x10xf32, #tpu.memory_space<vmem>>, vector<60x10xf32>
    %cst_44 = arith.constant dense<0.000000e+00> : vector<32x10xf32>
    %90 = tpu.matmul %88, %89, %cst_44 {dimension_numbers = #tpu.dot_dimension_numbers<[1], [0], [0], [1], [0, 0, 1, 1], [], []>} : vector<32x60xf32>, vector<60x10xf32>, vector<32x10xf32> -> vector<32x10xf32>
    %c0_45 = arith.constant 0 : index
    %c0_46 = arith.constant 0 : index
    %91 = vector.load %arg5[%c0_45, %c0_46] : memref<1x10xf32, #tpu.memory_space<vmem>>, vector<1x10xf32>
    %92 = vector.broadcast %91 : vector<1x10xf32> to vector<32x10xf32>
    %93 = arith.addf %90, %92 : vector<32x10xf32>
    %cst_47 = arith.constant 0.000000e+00 : f32
    %94 = vector.broadcast %cst_47 : f32 to vector<32x10xf32>
    %95 = arith.maximumf %93, %94 : vector<32x10xf32>
    %c0_48 = arith.constant 0 : index
    %c0_49 = arith.constant 0 : index
    %96 = vector.load %arg6[%c0_48, %c0_49] : memref<1x10xf32, #tpu.memory_space<vmem>>, vector<1x10xf32>
    %97 = tpu.transpose %95, [1, 0] : vector<32x10xf32> -> vector<10x32xf32>
    %cst_50 = arith.constant dense<0.000000e+00> : vector<1x32xf32>
    %98 = tpu.matmul %96, %97, %cst_50 {dimension_numbers = #tpu.dot_dimension_numbers<[1], [0], [0], [1], [0, 0, 1, 1], [], []>} : vector<1x10xf32>, vector<10x32xf32>, vector<1x32xf32> -> vector<1x32xf32>
    %c0_51 = arith.constant 0 : index
    %c0_52 = arith.constant 0 : index
    %99 = vector.load %arg7[%c0_51, %c0_52] : memref<1x1xf32, #tpu.memory_space<vmem>>, vector<1x1xf32>
    %100 = vector.broadcast %99 : vector<1x1xf32> to vector<1x32xf32>
    %101 = arith.addf %98, %100 : vector<1x32xf32>
    %cst_53 = arith.constant 0.000000e+00 : f32
    %102 = vector.broadcast %cst_53 : f32 to vector<1x32xf32>
    %103 = arith.maximumf %101, %102 : vector<1x32xf32>
    %c0_54 = arith.constant 0 : index
    %c0_55 = arith.constant 0 : index
    %104 = vector.load %arg8[%c0_54, %c0_55] : memref<1x32xf32, #tpu.memory_space<vmem>>, vector<1x32xf32>
    tpu.vector_store %arg8[%c0_54, %c0_55], %103 {strides = array<i32>} : memref<1x32xf32, #tpu.memory_space<vmem>>, vector<1x32xf32>,
    return
  }
}

</mosaic_0001>

<llo_original>
// kernel: tpu_custom_call.1
$region0: #{tpu_custom_call.1}
  #allocation0 [shape = 'u32[]', space=smem, size = 0x4, offset = 0x4, fixed_abs, tag = 'smem constant byte address 0x4 - core index']
  #allocation1 [shape = 'u32[144,128]{1,0:T(1,128)}', space=vmem, size = 0x12000, scoped, tag = 'internal scratch']
  #allocation2 [shape = 'f32[32,60]{1,0:T(8,128)}', space=vmem, size = 0x4000, scoped, tag = 'scratch operand']
  #allocation3 [shape = 'f32[32,60]{1,0:T(8,128)}', space=vmem, size = 0x4000, scoped, tag = 'scratch operand']
  #allocation4 [shape = 'f32[1,1]{1,0:T(1,128)S(1)}', space=vmem, size = 0x200, scoped, tag = 'scoped memory for tpu_custom_call.1']
  %s0 = inlined_call_operand.hbm [shape: f32[32,60], index: 0, kind: input, shape index: {}]
  %s1 = inlined_call_operand.vmem [shape: f32[60,60], index: 1, kind: input, shape index: {}]
  %s2 = inlined_call_operand.vmem [shape: f32[1,60], index: 2, kind: input, shape index: {}]
  %s3 = inlined_call_operand.hbm [shape: f32[60,60], index: 3, kind: input, shape index: {}]
  %s4 = inlined_call_operand.vmem [shape: f32[60,10], index: 4, kind: input, shape index: {}]
  %s5 = inlined_call_operand.vmem [shape: f32[1,10], index: 5, kind: input, shape index: {}]
  %s6 = inlined_call_operand.vmem [shape: f32[1,10], index: 6, kind: input, shape index: {}]
  %s7 = inlined_call_operand.<no memory space> [shape: f32[1,1], index: 7, kind: input, shape index: {}]
  %s8 = inlined_call_operand.hbm [shape: f32[1,32], index: 8, kind: output, shape index: {}]
  %s9 = sld [smem:[#allocation0]]
  $region50: #{tpu_custom_call.1} parent=0
    _
  %s11 = ssub.s32 1, %s9
  %s12 = scalar_select 0, %s11, %s9
  %v13 = vstv %s7
  %14 = vst [vmem:[#allocation4] sm:$0x1] %v13
  $region1: #{tpu_custom_call.1} parent=0
    #allocation5 [shape = 'u8[16384]{0}', space=vmem, size = 0x4000, scoped, tag = 'input window, operand 0, single buffered']
    #allocation6 [shape = 's32[1]{0}', space=sflag, size = 0x4, scoped, tag = 'scoped memory for tpu_custom_call.1']
    #allocation7 [shape = 's32[1]{0}', space=sflag, size = 0x4, scoped, tag = 'scoped memory for tpu_custom_call.1']
    #allocation8 [shape = 'u8[32768]{0}', space=vmem, size = 0x8000, scoped, tag = 'input window, operand 3, single buffered']
    #allocation9 [shape = 's32[1]{0}', space=sflag, size = 0x4, scoped, tag = 'scoped memory for tpu_custom_call.1']
    #allocation10 [shape = 'u8[512]{0}', space=vmem, size = 0x400, scoped, tag = 'output window, operand 0, single buffered']
    %15 = vsyncpa [#allocation6], 0
    %16 = vsyncpa [#allocation9], 0
    %17 = vsyncpa [#allocation7], 0
    // Predicated region
    $region2: #{tpu_custom_call.1} parent=1 // pred_check
      _
    $region3: #{tpu_custom_call.1} parent=1 // pred_check_branch
      %19 = sbr.rel (0) target = $region5
    $region4: #{tpu_custom_call.1} parent=1 // pred_region
      %s21 = ssub.s32 512, 512
      %22 = vsyncadd [#allocation6], %s21
      %s23 = sshll.u32 [#allocation5], 4
      %s24 = int_to_ptr.vmem [resolvable:$true] %s23
      %29 = dma.hbm_to_vmem [thread:$0]  %s0, 512, %s24, [#allocation6], 128, 128, 8
    $region5: #{tpu_custom_call.1} parent=1 // pred_fallthru
      _
    // Predicated region
    $region6: #{tpu_custom_call.1} parent=1 // pred_check
      _
    $region7: #{tpu_custom_call.1} parent=1 // pred_check_branch
      %31 = sbr.rel (0) target = $region9
    $region8: #{tpu_custom_call.1} parent=1 // pred_region
      _
    $region9: #{tpu_custom_call.1} parent=1 // pred_fallthru
      _
    // Predicated region
    $region10: #{tpu_custom_call.1} parent=1 // pred_check
      _
    $region11: #{tpu_custom_call.1} parent=1 // pred_check_branch
      %33 = sbr.rel (0) target = $region13
    $region12: #{tpu_custom_call.1} parent=1 // pred_region
      _
    $region13: #{tpu_custom_call.1} parent=1 // pred_fallthru
      _
    // Predicated region
    $region14: #{tpu_custom_call.1} parent=1 // pred_check
      _
    $region15: #{tpu_custom_call.1} parent=1 // pred_check_branch
      %35 = sbr.rel (0) target = $region17
    $region16: #{tpu_custom_call.1} parent=1 // pred_region
      %s37 = ssub.s32 1024, 1024
      %38 = vsyncadd [#allocation9], %s37
      %s39 = sshll.u32 [#allocation8], 4
      %s40 = int_to_ptr.vmem [resolvable:$true] %s39
      %45 = dma.hbm_to_vmem [thread:$0]  %s3, 1024, %s40, [#allocation9], 128, 128, 8
    $region17: #{tpu_custom_call.1} parent=1 // pred_fallthru
      _
    // Predicated region
    $region18: #{tpu_custom_call.1} parent=1 // pred_check
      _
    $region19: #{tpu_custom_call.1} parent=1 // pred_check_branch
      %47 = sbr.rel (0) target = $region21
    $region20: #{tpu_custom_call.1} parent=1 // pred_region
      _
    $region21: #{tpu_custom_call.1} parent=1 // pred_fallthru
      _
    // Predicated region
    $region22: #{tpu_custom_call.1} parent=1 // pred_check
      _
    $region23: #{tpu_custom_call.1} parent=1 // pred_check_branch
      %49 = sbr.rel (0) target = $region25
    $region24: #{tpu_custom_call.1} parent=1 // pred_region
      _
    $region25: #{tpu_custom_call.1} parent=1 // pred_fallthru
      _
    // Predicated region
    $region26: #{tpu_custom_call.1} parent=1 // pred_check
      _
    $region27: #{tpu_custom_call.1} parent=1 // pred_check_branch
      %51 = sbr.rel (0) target = $region29
    $region28: #{tpu_custom_call.1} parent=1 // pred_region
      _
    $region29: #{tpu_custom_call.1} parent=1 // pred_fallthru
      _
    // Predicated region
    $region30: #{tpu_custom_call.1} parent=1 // pred_check
      _
    $region31: #{tpu_custom_call.1} parent=1 // pred_check_branch
      %53 = sbr.rel (0) target = $region33
    $region32: #{tpu_custom_call.1} parent=1 // pred_region
      _
    $region33: #{tpu_custom_call.1} parent=1 // pred_fallthru
      _
    // Predicated region
    $region34: #{tpu_custom_call.1} parent=1 // pred_check
      _
    $region35: #{tpu_custom_call.1} parent=1 // pred_check_branch
      %55 = sbr.rel (0) target = $region37
    $region36: #{tpu_custom_call.1} parent=1 // pred_region
      %56 = dma.done [#allocation6], 512
    $region37: #{tpu_custom_call.1} parent=1 // pred_fallthru
      _
    // Predicated region
    $region38: #{tpu_custom_call.1} parent=1 // pred_check
      _
    $region39: #{tpu_custom_call.1} parent=1 // pred_check_branch
      %58 = sbr.rel (0) target = $region41
    $region40: #{tpu_custom_call.1} parent=1 // pred_region
      %59 = dma.done [#allocation9], 1024
    $region41: #{tpu_custom_call.1} parent=1 // pred_fallthru
      _
    %v60 = vld [vmem:[#allocation5] sm:$0xff]
    %v61 = vld [vmem:[#allocation5 + $0x8] sm:$0xff]
    %v62 = vld [vmem:[#allocation5 + $0x10] sm:$0xff]
    %v63 = vld [vmem:[#allocation5 + $0x18] sm:$0xff]
    %v64 = vld [vmem:[%s1] sm:$0xff]
    %v65 = vld [vmem:[%s1 + $0x8] sm:$0xff]
    %v66 = vld [vmem:[%s1 + $0x10] sm:$0xff]
    %v67 = vld [vmem:[%s1 + $0x18] sm:$0xff]
    %v68 = vld [vmem:[%s1 + $0x20] sm:$0xff]
    %v69 = vld [vmem:[%s1 + $0x28] sm:$0xff]
    %v70 = vld [vmem:[%s1 + $0x30] sm:$0xff]
    %v71 = vld [vmem:[%s1 + $0x38] sm:$0xf]
    %v72 = vld [vmem:[%s2] sm:$0x1]
    %v74 = vlaneseq
    %v75 = vshrl.u32 %v74, 7
    %v76 = vsub.s32 0, %v75
    %v77 = vrot.slane %v72, %v76
    %vm79 = vcmask 490496
    %v81 = vsel %vm79, %v60, 0
    %v84 = vsel %vm79, %v61, 0
    %v87 = vsel %vm79, %v62, 0
    %v90 = vsel %vm79, %v63, 0
    %vm92 = vcmask 1043456
    %v94 = vsel %vm92, %v71, 0
    %96 = vmatprep.subr.mxu0 0.0
    %97 = vmatpush1.msra.mxu0 0.0
    %98 = vmatprep.subr.mxu0 0.0
    %99 = vmatpush1.msra.mxu0 0.0
    %100 = vmatprep.subr.mxu0 0.0
    %101 = vmatpush1.msra.mxu0 0.0
    %102 = vmatprep.subr.mxu0 0.0
    %103 = vmatpush1.msra.mxu0 0.0
    %104 = vmatprep.subr.mxu0 0.0
    %105 = vmatpush1.msra.mxu0 0.0
    %106 = vmatprep.subr.mxu0 0.0
    %107 = vmatpush1.msra.mxu0 0.0
    %108 = vmatprep.subr.mxu0 0.0
    %109 = vmatpush1.msra.mxu0 0.0
    %110 = vmatprep.subr.mxu0 0.0
    %111 = vmatpush1.msra.mxu0 0.0
    %112 = vmatprep.subr.mxu0 0.0
    %113 = vmatpush1.msra.mxu0 %v94
    %114 = vmatprep.subr.mxu0 0.0
    %115 = vmatpush1.msra.mxu0 %v70
    %116 = vmatprep.subr.mxu0 0.0
    %117 = vmatpush1.msra.mxu0 %v69
    %118 = vmatprep.subr.mxu0 0.0
    %119 = vmatpush1.msra.mxu0 %v68
    %120 = vmatprep.subr.mxu0 0.0
    %121 = vmatpush1.msra.mxu0 %v67
    %122 = vmatprep.subr.mxu0 0.0
    %123 = vmatpush1.msra.mxu0 %v66
    %124 = vmatprep.subr.mxu0 0.0
    %125 = vmatpush1.msra.mxu0 %v65
    %126 = vmatprep.subr.mxu0 0.0
    %127 = vmatpush1.msra.mxu0 %v64
    %128 = vmatprep.subr.mxu0 0.0
    %129 = vmatpush2.msra.mxu0 0.0
    %130 = vmatprep.subr.mxu0 0.0
    %131 = vmatpush2.msra.mxu0 0.0
    %132 = vmatprep.subr.mxu0 0.0
    %133 = vmatpush2.msra.mxu0 0.0
    %134 = vmatprep.subr.mxu0 0.0
    %135 = vmatpush2.msra.mxu0 0.0
    %136 = vmatprep.subr.mxu0 0.0
    %137 = vmatpush2.msra.mxu0 0.0
    %138 = vmatprep.subr.mxu0 0.0
    %139 = vmatpush2.msra.mxu0 0.0
    %140 = vmatprep.subr.mxu0 0.0
    %141 = vmatpush2.msra.mxu0 0.0
    %142 = vmatprep.subr.mxu0 0.0
    %143 = vmatpush2.msra.mxu0 0.0
    %144 = vmatprep.subr.mxu0 0.0
    %145 = vmatpush2.msra.mxu0 0.0
    %146 = vmatprep.subr.mxu0 0.0
    %147 = vmatpush2.msra.mxu0 0.0
    %148 = vmatprep.subr.mxu0 0.0
    %149 = vmatpush2.msra.mxu0 0.0
    %150 = vmatprep.subr.mxu0 0.0
    %151 = vmatpush2.msra.mxu0 0.0
    %152 = vmatprep.subr.mxu0 0.0
    %153 = vmatpush2.msra.mxu0 0.0
    %154 = vmatprep.subr.mxu0 0.0
    %155 = vmatpush2.msra.mxu0 0.0
    %156 = vmatprep.subr.mxu0 0.0
    %157 = vmatpush2.msra.mxu0 0.0
    %158 = vmatprep.subr.mxu0 0.0
    %159 = vmatpush2.msra.mxu0 0.0
    %160 = vmatprep.mubr.f32.mxu0 0.0
    %161 = vmatmul.mubr.f32.gmra.mxu0 %v81
    %v162 = vpop.f32.mrf.mxu0
    %v163 = vadd.f32 %v77, %v162
    %v164 = vpop.f32.mrf.mxu0
    %165 = vmatprep.mubr.f32.mxu0 0.0
    %166 = vmatmul.mubr.f32.gmra.mxu0 %v84
    %v167 = vpop.f32.mrf.mxu0
    %v168 = vadd.f32 %v77, %v167
    %v169 = vpop.f32.mrf.mxu0
    %170 = vmatprep.mubr.f32.mxu0 0.0
    %171 = vmatmul.mubr.f32.gmra.mxu0 %v87
    %v172 = vpop.f32.mrf.mxu0
    %v173 = vadd.f32 %v77, %v172
    %v174 = vpop.f32.mrf.mxu0
    %175 = vmatprep.mubr.f32.mxu0 0.0
    %176 = vmatmul.mubr.f32.gmra.mxu0 %v90
    %v177 = vpop.f32.mrf.mxu0
    %v178 = vadd.f32 %v77, %v177
    %v179 = vpop.f32.mrf.mxu0
    %180 = vdwg.mxu0
    %181 = vst.msk [vmem:[#allocation2] sm:$0xff] %vm79, %v163
    %182 = vst.msk [vmem:[#allocation2 + $0x8] sm:$0xff] %vm79, %v168
    %183 = vst.msk [vmem:[#allocation2 + $0x10] sm:$0xff] %vm79, %v173
    %184 = vst.msk [vmem:[#allocation2 + $0x18] sm:$0xff] %vm79, %v178
    %v185 = vld [vmem:[#allocation8] sm:$0xff]
    %v186 = vld [vmem:[#allocation8 + $0x8] sm:$0xff]
    %v187 = vld [vmem:[#allocation8 + $0x10] sm:$0xff]
    %v188 = vld [vmem:[#allocation8 + $0x18] sm:$0xff]
    %v189 = vld [vmem:[#allocation8 + $0x20] sm:$0xff]
    %v190 = vld [vmem:[#allocation8 + $0x28] sm:$0xff]
    %v191 = vld [vmem:[#allocation8 + $0x30] sm:$0xff]
    %v192 = vld [vmem:[#allocation8 + $0x38] sm:$0xf]
    %v193 = vlaneseq
    %v194 = vand.u32 %v193, 127
    %vm195 = vcmp.lt.s32.totalorder %v194, 30
    %v196 = vld [vmem:[#allocation2] sm:$0xff]
    %s197 = scalar_lea.vmem [#allocation2], 24
    %v198 = vld [vmem:[%s197] sm:$0xff]
    %v199 = vsel %vm195, %v196, %v198
    %v201 = vsel %vm79, 0.0, 0
    %v204 = vsel %vm92, %v192, 0
    %206 = vmatprep.subr.mxu0 0.0
    %207 = vmatpush1.msra.mxu0 0.0
    %208 = vmatprep.subr.mxu0 0.0
    %209 = vmatpush1.msra.mxu0 0.0
    %210 = vmatprep.subr.mxu0 0.0
    %211 = vmatpush1.msra.mxu0 0.0
    %212 = vmatprep.subr.mxu0 0.0
    %213 = vmatpush1.msra.mxu0 0.0
    %214 = vmatprep.subr.mxu0 0.0
    %215 = vmatpush1.msra.mxu0 0.0
    %216 = vmatprep.subr.mxu0 0.0
    %217 = vmatpush1.msra.mxu0 0.0
    %218 = vmatprep.subr.mxu0 0.0
    %219 = vmatpush1.msra.mxu0 0.0
    %220 = vmatprep.subr.mxu0 0.0
    %221 = vmatpush1.msra.mxu0 0.0
    %222 = vmatprep.subr.mxu0 0.0
    %223 = vmatpush1.msra.mxu0 %v204
    %224 = vmatprep.subr.mxu0 0.0
    %225 = vmatpush1.msra.mxu0 %v191
    %226 = vmatprep.subr.mxu0 0.0
    %227 = vmatpush1.msra.mxu0 %v190
    %228 = vmatprep.subr.mxu0 0.0
    %229 = vmatpush1.msra.mxu0 %v189
    %230 = vmatprep.subr.mxu0 0.0
    %231 = vmatpush1.msra.mxu0 %v188
    %232 = vmatprep.subr.mxu0 0.0
    %233 = vmatpush1.msra.mxu0 %v187
    %234 = vmatprep.subr.mxu0 0.0
    %235 = vmatpush1.msra.mxu0 %v186
    %236 = vmatprep.subr.mxu0 0.0
    %237 = vmatpush1.msra.mxu0 %v185
    %238 = vmatprep.subr.mxu0 0.0
    %239 = vmatpush2.msra.mxu0 0.0
    %240 = vmatprep.subr.mxu0 0.0
    %241 = vmatpush2.msra.mxu0 0.0
    %242 = vmatprep.subr.mxu0 0.0
    %243 = vmatpush2.msra.mxu0 0.0
    %244 = vmatprep.subr.mxu0 0.0
    %245 = vmatpush2.msra.mxu0 0.0
    %246 = vmatprep.subr.mxu0 0.0
    %247 = vmatpush2.msra.mxu0 0.0
    %248 = vmatprep.subr.mxu0 0.0
    %249 = vmatpush2.msra.mxu0 0.0
    %250 = vmatprep.subr.mxu0 0.0
    %251 = vmatpush2.msra.mxu0 0.0
    %252 = vmatprep.subr.mxu0 0.0
    %253 = vmatpush2.msra.mxu0 0.0
    %254 = vmatprep.subr.mxu0 0.0
    %255 = vmatpush2.msra.mxu0 0.0
    %256 = vmatprep.subr.mxu0 0.0
    %257 = vmatpush2.msra.mxu0 0.0
    %258 = vmatprep.subr.mxu0 0.0
    %259 = vmatpush2.msra.mxu0 0.0
    %260 = vmatprep.subr.mxu0 0.0
    %261 = vmatpush2.msra.mxu0 0.0
    %262 = vmatprep.subr.mxu0 0.0
    %263 = vmatpush2.msra.mxu0 0.0
    %264 = vmatprep.subr.mxu0 0.0
    %265 = vmatpush2.msra.mxu0 0.0
    %266 = vmatprep.subr.mxu0 0.0
    %267 = vmatpush2.msra.mxu0 0.0
    %268 = vmatprep.subr.mxu0 0.0
    %269 = vmatpush2.msra.mxu0 0.0
    %270 = vmatprep.mubr.f32.mxu0 0.0
    %271 = vmatmul.mubr.f32.gmra.mxu0 %v201
    %v272 = vpop.f32.mrf.mxu0
    %v273 = vadd.f32 0.0, %v272
    %v274 = vpop.f32.mrf.mxu0
    %275 = vdwg.mxu0
    %v276 = vadd.f32 %v199, %v273
    %v277 = vtanh.pop %v276
    %vm278 = vcmask 244736
    %279 = vst.msk [vmem:[#allocation3] sm:$0xff] %vm278, %v277
    %s280 = scalar_lea.vmem [#allocation3], 24
    %vm281 = vcmask 490736
    %282 = vst.msk [vmem:[%s280] sm:$0xff] %vm281, %v277
    %s283 = scalar_lea.vmem [#allocation2], 8
    %v284 = vld [vmem:[%s283] sm:$0xff]
    %s285 = scalar_lea.vmem [#allocation2], 16
    %v286 = vld [vmem:[%s285] sm:$0xff]
    %v287 = vsel %vm195, %v284, %v286
    %v289 = vsel %vm79, %v277, 0
    %291 = vmatprep.subr.mxu0 0.0
    %292 = vmatpush1.msra.mxu0 0.0
    %293 = vmatprep.subr.mxu0 0.0
    %294 = vmatpush1.msra.mxu0 0.0
    %295 = vmatprep.subr.mxu0 0.0
    %296 = vmatpush1.msra.mxu0 0.0
    %297 = vmatprep.subr.mxu0 0.0
    %298 = vmatpush1.msra.mxu0 0.0
    %299 = vmatprep.subr.mxu0 0.0
    %300 = vmatpush1.msra.mxu0 0.0
    %301 = vmatprep.subr.mxu0 0.0
    %302 = vmatpush1.msra.mxu0 0.0
    %303 = vmatprep.subr.mxu0 0.0
    %304 = vmatpush1.msra.mxu0 0.0
    %305 = vmatprep.subr.mxu0 0.0
    %306 = vmatpush1.msra.mxu0 0.0
    %307 = vmatprep.subr.mxu0 0.0
    %308 = vmatpush1.msra.mxu0 %v204
    %309 = vmatprep.subr.mxu0 0.0
    %310 = vmatpush1.msra.mxu0 %v191
    %311 = vmatprep.subr.mxu0 0.0
    %312 = vmatpush1.msra.mxu0 %v190
    %313 = vmatprep.subr.mxu0 0.0
    %314 = vmatpush1.msra.mxu0 %v189
    %315 = vmatprep.subr.mxu0 0.0
    %316 = vmatpush1.msra.mxu0 %v188
    %317 = vmatprep.subr.mxu0 0.0
    %318 = vmatpush1.msra.mxu0 %v187
    %319 = vmatprep.subr.mxu0 0.0
    %320 = vmatpush1.msra.mxu0 %v186
    %321 = vmatprep.subr.mxu0 0.0
    %322 = vmatpush1.msra.mxu0 %v185
    %323 = vmatprep.subr.mxu0 0.0
    %324 = vmatpush2.msra.mxu0 0.0
    %325 = vmatprep.subr.mxu0 0.0
    %326 = vmatpush2.msra.mxu0 0.0
    %327 = vmatprep.subr.mxu0 0.0
    %328 = vmatpush2.msra.mxu0 0.0
    %329 = vmatprep.subr.mxu0 0.0
    %330 = vmatpush2.msra.mxu0 0.0
    %331 = vmatprep.subr.mxu0 0.0
    %332 = vmatpush2.msra.mxu0 0.0
    %333 = vmatprep.subr.mxu0 0.0
    %334 = vmatpush2.msra.mxu0 0.0
    %335 = vmatprep.subr.mxu0 0.0
    %336 = vmatpush2.msra.mxu0 0.0
    %337 = vmatprep.subr.mxu0 0.0
    %338 = vmatpush2.msra.mxu0 0.0
    %339 = vmatprep.subr.mxu0 0.0
    %340 = vmatpush2.msra.mxu0 0.0
    %341 = vmatprep.subr.mxu0 0.0
    %342 = vmatpush2.msra.mxu0 0.0
    %343 = vmatprep.subr.mxu0 0.0
    %344 = vmatpush2.msra.mxu0 0.0
    %345 = vmatprep.subr.mxu0 0.0
    %346 = vmatpush2.msra.mxu0 0.0
    %347 = vmatprep.subr.mxu0 0.0
    %348 = vmatpush2.msra.mxu0 0.0
    %349 = vmatprep.subr.mxu0 0.0
    %350 = vmatpush2.msra.mxu0 0.0
    %351 = vmatprep.subr.mxu0 0.0
    %352 = vmatpush2.msra.mxu0 0.0
    %353 = vmatprep.subr.mxu0 0.0
    %354 = vmatpush2.msra.mxu0 0.0
    %355 = vmatprep.mubr.f32.mxu0 0.0
    %356 = vmatmul.mubr.f32.gmra.mxu0 %v289
    %v357 = vpop.f32.mrf.mxu0
    %v358 = vadd.f32 0.0, %v357
    %v359 = vpop.f32.mrf.mxu0
    %360 = vdwg.mxu0
    %v361 = vadd.f32 %v287, %v358
    %v362 = vtanh.pop %v361
    %s363 = scalar_lea.vmem [#allocation3], 8
    %364 = vst.msk [vmem:[%s363] sm:$0xff] %vm278, %v362
    %s365 = scalar_lea.vmem [#allocation3], 16
    %366 = vst.msk [vmem:[%s365] sm:$0xff] %vm281, %v362
    %v367 = vld [vmem:[%s285] sm:$0xff]
    %v368 = vld [vmem:[%s283] sm:$0xff]
    %v369 = vsel %vm195, %v367, %v368
    %v371 = vsel %vm79, %v362, 0
    %373 = vmatprep.subr.mxu0 0.0
    %374 = vmatpush1.msra.mxu0 0.0
    %375 = vmatprep.subr.mxu0 0.0
    %376 = vmatpush1.msra.mxu0 0.0
    %377 = vmatprep.subr.mxu0 0.0
    %378 = vmatpush1.msra.mxu0 0.0
    %379 = vmatprep.subr.mxu0 0.0
    %380 = vmatpush1.msra.mxu0 0.0
    %381 = vmatprep.subr.mxu0 0.0
    %382 = vmatpush1.msra.mxu0 0.0
    %383 = vmatprep.subr.mxu0 0.0
    %384 = vmatpush1.msra.mxu0 0.0
    %385 = vmatprep.subr.mxu0 0.0
    %386 = vmatpush1.msra.mxu0 0.0
    %387 = vmatprep.subr.mxu0 0.0
    %388 = vmatpush1.msra.mxu0 0.0
    %389 = vmatprep.subr.mxu0 0.0
    %390 = vmatpush1.msra.mxu0 %v204
    %391 = vmatprep.subr.mxu0 0.0
    %392 = vmatpush1.msra.mxu0 %v191
    %393 = vmatprep.subr.mxu0 0.0
    %394 = vmatpush1.msra.mxu0 %v190
    %395 = vmatprep.subr.mxu0 0.0
    %396 = vmatpush1.msra.mxu0 %v189
    %397 = vmatprep.subr.mxu0 0.0
    %398 = vmatpush1.msra.mxu0 %v188
    %399 = vmatprep.subr.mxu0 0.0
    %400 = vmatpush1.msra.mxu0 %v187
    %401 = vmatprep.subr.mxu0 0.0
    %402 = vmatpush1.msra.mxu0 %v186
    %403 = vmatprep.subr.mxu0 0.0
    %404 = vmatpush1.msra.mxu0 %v185
    %405 = vmatprep.subr.mxu0 0.0
    %406 = vmatpush2.msra.mxu0 0.0
    %407 = vmatprep.subr.mxu0 0.0
    %408 = vmatpush2.msra.mxu0 0.0
    %409 = vmatprep.subr.mxu0 0.0
    %410 = vmatpush2.msra.mxu0 0.0
    %411 = vmatprep.subr.mxu0 0.0
    %412 = vmatpush2.msra.mxu0 0.0
    %413 = vmatprep.subr.mxu0 0.0
    %414 = vmatpush2.msra.mxu0 0.0
    %415 = vmatprep.subr.mxu0 0.0
    %416 = vmatpush2.msra.mxu0 0.0
    %417 = vmatprep.subr.mxu0 0.0
    %418 = vmatpush2.msra.mxu0 0.0
    %419 = vmatprep.subr.mxu0 0.0
    %420 = vmatpush2.msra.mxu0 0.0
    %421 = vmatprep.subr.mxu0 0.0
    %422 = vmatpush2.msra.mxu0 0.0
    %423 = vmatprep.subr.mxu0 0.0
    %424 = vmatpush2.msra.mxu0 0.0
    %425 = vmatprep.subr.mxu0 0.0
    %426 = vmatpush2.msra.mxu0 0.0
    %427 = vmatprep.subr.mxu0 0.0
    %428 = vmatpush2.msra.mxu0 0.0
    %429 = vmatprep.subr.mxu0 0.0
    %430 = vmatpush2.msra.mxu0 0.0
    %431 = vmatprep.subr.mxu0 0.0
    %432 = vmatpush2.msra.mxu0 0.0
    %433 = vmatprep.subr.mxu0 0.0
    %434 = vmatpush2.msra.mxu0 0.0
    %435 = vmatprep.subr.mxu0 0.0
    %436 = vmatpush2.msra.mxu0 0.0
    %437 = vmatprep.mubr.f32.mxu0 0.0
    %438 = vmatmul.mubr.f32.gmra.mxu0 %v371
    %v439 = vpop.f32.mrf.mxu0
    %v440 = vadd.f32 0.0, %v439
    %v441 = vpop.f32.mrf.mxu0
    %442 = vdwg.mxu0
    %v443 = vadd.f32 %v369, %v440
    %v444 = vtanh.pop %v443
    %445 = vst.msk [vmem:[%s365] sm:$0xff] %vm278, %v444
    %446 = vst.msk [vmem:[%s363] sm:$0xff] %vm281, %v444
    %v447 = vld [vmem:[%s197] sm:$0xff]
    %v448 = vld [vmem:[#allocation2] sm:$0xff]
    %v449 = vsel %vm195, %v447, %v448
    %v451 = vsel %vm79, %v444, 0
    %453 = vmatprep.subr.mxu0 0.0
    %454 = vmatpush1.msra.mxu0 0.0
    %455 = vmatprep.subr.mxu0 0.0
    %456 = vmatpush1.msra.mxu0 0.0
    %457 = vmatprep.subr.mxu0 0.0
    %458 = vmatpush1.msra.mxu0 0.0
    %459 = vmatprep.subr.mxu0 0.0
    %460 = vmatpush1.msra.mxu0 0.0
    %461 = vmatprep.subr.mxu0 0.0
    %462 = vmatpush1.msra.mxu0 0.0
    %463 = vmatprep.subr.mxu0 0.0
    %464 = vmatpush1.msra.mxu0 0.0
    %465 = vmatprep.subr.mxu0 0.0
    %466 = vmatpush1.msra.mxu0 0.0
    %467 = vmatprep.subr.mxu0 0.0
    %468 = vmatpush1.msra.mxu0 0.0
    %469 = vmatprep.subr.mxu0 0.0
    %470 = vmatpush1.msra.mxu0 %v204
    %471 = vmatprep.subr.mxu0 0.0
    %472 = vmatpush1.msra.mxu0 %v191
    %473 = vmatprep.subr.mxu0 0.0
    %474 = vmatpush1.msra.mxu0 %v190
    %475 = vmatprep.subr.mxu0 0.0
    %476 = vmatpush1.msra.mxu0 %v189
    %477 = vmatprep.subr.mxu0 0.0
    %478 = vmatpush1.msra.mxu0 %v188
    %479 = vmatprep.subr.mxu0 0.0
    %480 = vmatpush1.msra.mxu0 %v187
    %481 = vmatprep.subr.mxu0 0.0
    %482 = vmatpush1.msra.mxu0 %v186
    %483 = vmatprep.subr.mxu0 0.0
    %484 = vmatpush1.msra.mxu0 %v185
    %485 = vmatprep.subr.mxu0 0.0
    %486 = vmatpush2.msra.mxu0 0.0
    %487 = vmatprep.subr.mxu0 0.0
    %488 = vmatpush2.msra.mxu0 0.0
    %489 = vmatprep.subr.mxu0 0.0
    %490 = vmatpush2.msra.mxu0 0.0
    %491 = vmatprep.subr.mxu0 0.0
    %492 = vmatpush2.msra.mxu0 0.0
    %493 = vmatprep.subr.mxu0 0.0
    %494 = vmatpush2.msra.mxu0 0.0
    %495 = vmatprep.subr.mxu0 0.0
    %496 = vmatpush2.msra.mxu0 0.0
    %497 = vmatprep.subr.mxu0 0.0
    %498 = vmatpush2.msra.mxu0 0.0
    %499 = vmatprep.subr.mxu0 0.0
    %500 = vmatpush2.msra.mxu0 0.0
    %501 = vmatprep.subr.mxu0 0.0
    %502 = vmatpush2.msra.mxu0 0.0
    %503 = vmatprep.subr.mxu0 0.0
    %504 = vmatpush2.msra.mxu0 0.0
    %505 = vmatprep.subr.mxu0 0.0
    %506 = vmatpush2.msra.mxu0 0.0
    %507 = vmatprep.subr.mxu0 0.0
    %508 = vmatpush2.msra.mxu0 0.0
    %509 = vmatprep.subr.mxu0 0.0
    %510 = vmatpush2.msra.mxu0 0.0
    %511 = vmatprep.subr.mxu0 0.0
    %512 = vmatpush2.msra.mxu0 0.0
    %513 = vmatprep.subr.mxu0 0.0
    %514 = vmatpush2.msra.mxu0 0.0
    %515 = vmatprep.subr.mxu0 0.0
    %516 = vmatpush2.msra.mxu0 0.0
    %517 = vmatprep.mubr.f32.mxu0 0.0
    %518 = vmatmul.mubr.f32.gmra.mxu0 %v451
    %v519 = vpop.f32.mrf.mxu0
    %v520 = vadd.f32 0.0, %v519
    %v521 = vpop.f32.mrf.mxu0
    %522 = vdwg.mxu0
    %v523 = vadd.f32 %v449, %v520
    %v524 = vtanh.pop %v523
    %525 = vst.msk [vmem:[%s280] sm:$0xff] %vm278, %v524
    %526 = vst.msk [vmem:[#allocation3] sm:$0xff] %vm281, %v524
    %v527 = vld [vmem:[#allocation3] sm:$0xff]
    %v528 = vld [vmem:[#allocation3 + $0x8] sm:$0xff]
    %v529 = vld [vmem:[#allocation3 + $0x10] sm:$0xff]
    %v530 = vld [vmem:[#allocation3 + $0x18] sm:$0xff]
    %v531 = vld [vmem:[%s4] sm:$0xff]
    %v532 = vld [vmem:[%s4 + $0x8] sm:$0xff]
    %v533 = vld [vmem:[%s4 + $0x10] sm:$0xff]
    %v534 = vld [vmem:[%s4 + $0x18] sm:$0xff]
    %v535 = vld [vmem:[%s4 + $0x20] sm:$0xff]
    %v536 = vld [vmem:[%s4 + $0x28] sm:$0xff]
    %v537 = vld [vmem:[%s4 + $0x30] sm:$0xff]
    %v538 = vld [vmem:[%s4 + $0x38] sm:$0xf]
    %v539 = vld [vmem:[%s5] sm:$0x1]
    %v541 = vlaneseq
    %v542 = vshrl.u32 %v541, 7
    %v543 = vsub.s32 0, %v542
    %v544 = vrot.slane %v539, %v543
    %v547 = vsel %vm79, %v527, 0
    %v550 = vsel %vm79, %v528, 0
    %v553 = vsel %vm79, %v529, 0
    %v556 = vsel %vm79, %v530, 0
    %v559 = vsel %vm92, %v538, 0
    %561 = vmatprep.subr.mxu0 0.0
    %562 = vmatpush1.msra.mxu0 0.0
    %563 = vmatprep.subr.mxu0 0.0
    %564 = vmatpush1.msra.mxu0 0.0
    %565 = vmatprep.subr.mxu0 0.0
    %566 = vmatpush1.msra.mxu0 0.0
    %567 = vmatprep.subr.mxu0 0.0
    %568 = vmatpush1.msra.mxu0 0.0
    %569 = vmatprep.subr.mxu0 0.0
    %570 = vmatpush1.msra.mxu0 0.0
    %571 = vmatprep.subr.mxu0 0.0
    %572 = vmatpush1.msra.mxu0 0.0
    %573 = vmatprep.subr.mxu0 0.0
    %574 = vmatpush1.msra.mxu0 0.0
    %575 = vmatprep.subr.mxu0 0.0
    %576 = vmatpush1.msra.mxu0 0.0
    %577 = vmatprep.subr.mxu0 0.0
    %578 = vmatpush1.msra.mxu0 %v559
    %579 = vmatprep.subr.mxu0 0.0
    %580 = vmatpush1.msra.mxu0 %v537
    %581 = vmatprep.subr.mxu0 0.0
    %582 = vmatpush1.msra.mxu0 %v536
    %583 = vmatprep.subr.mxu0 0.0
    %584 = vmatpush1.msra.mxu0 %v535
    %585 = vmatprep.subr.mxu0 0.0
    %586 = vmatpush1.msra.mxu0 %v534
    %587 = vmatprep.subr.mxu0 0.0
    %588 = vmatpush1.msra.mxu0 %v533
    %589 = vmatprep.subr.mxu0 0.0
    %590 = vmatpush1.msra.mxu0 %v532
    %591 = vmatprep.subr.mxu0 0.0
    %592 = vmatpush1.msra.mxu0 %v531
    %593 = vmatprep.subr.mxu0 0.0
    %594 = vmatpush2.msra.mxu0 0.0
    %595 = vmatprep.subr.mxu0 0.0
    %596 = vmatpush2.msra.mxu0 0.0
    %597 = vmatprep.subr.mxu0 0.0
    %598 = vmatpush2.msra.mxu0 0.0
    %599 = vmatprep.subr.mxu0 0.0
    %600 = vmatpush2.msra.mxu0 0.0
    %601 = vmatprep.subr.mxu0 0.0
    %602 = vmatpush2.msra.mxu0 0.0
    %603 = vmatprep.subr.mxu0 0.0
    %604 = vmatpush2.msra.mxu0 0.0
    %605 = vmatprep.subr.mxu0 0.0
    %606 = vmatpush2.msra.mxu0 0.0
    %607 = vmatprep.subr.mxu0 0.0
    %608 = vmatpush2.msra.mxu0 0.0
    %609 = vmatprep.subr.mxu0 0.0
    %610 = vmatpush2.msra.mxu0 0.0
    %611 = vmatprep.subr.mxu0 0.0
    %612 = vmatpush2.msra.mxu0 0.0
    %613 = vmatprep.subr.mxu0 0.0
    %614 = vmatpush2.msra.mxu0 0.0
    %615 = vmatprep.subr.mxu0 0.0
    %616 = vmatpush2.msra.mxu0 0.0
    %617 = vmatprep.subr.mxu0 0.0
    %618 = vmatpush2.msra.mxu0 0.0
    %619 = vmatprep.subr.mxu0 0.0
    %620 = vmatpush2.msra.mxu0 0.0
    %621 = vmatprep.subr.mxu0 0.0
    %622 = vmatpush2.msra.mxu0 0.0
    %623 = vmatprep.subr.mxu0 0.0
    %624 = vmatpush2.msra.mxu0 0.0
    %625 = vmatprep.mubr.f32.mxu0 0.0
    %626 = vmatmul.mubr.f32.gmra.mxu0 %v547
    %v627 = vpop.f32.mrf.mxu0
    %v628 = vadd.f32 %v544, %v627
    %v629 = vpop.f32.mrf.mxu0
    %630 = vmatprep.mubr.f32.mxu0 0.0
    %631 = vmatmul.mubr.f32.gmra.mxu0 %v550
    %v632 = vpop.f32.mrf.mxu0
    %v633 = vadd.f32 %v544, %v632
    %v634 = vpop.f32.mrf.mxu0
    %635 = vmatprep.mubr.f32.mxu0 0.0
    %636 = vmatmul.mubr.f32.gmra.mxu0 %v553
    %v637 = vpop.f32.mrf.mxu0
    %v638 = vadd.f32 %v544, %v637
    %v639 = vpop.f32.mrf.mxu0
    %640 = vmatprep.mubr.f32.mxu0 0.0
    %641 = vmatmul.mubr.f32.gmra.mxu0 %v556
    %v642 = vpop.f32.mrf.mxu0
    %v643 = vadd.f32 %v544, %v642
    %v644 = vpop.f32.mrf.mxu0
    %645 = vdwg.mxu0
    %v646 = vmax.f32 %v628, 0.0
    %v647 = vmax.f32 %v633, 0.0
    %v648 = vmax.f32 %v638, 0.0
    %v649 = vmax.f32 %v643, 0.0
    %v650 = vld [vmem:[%s6] sm:$0x1]
    %v651 = vld [vmem:[#allocation4] sm:$0x1]
    %653 = vset.pattern.permute.xlu0 0
    %654 = vperm.xlu0 %653, %v651
    %v655 = vpop.permute.xlu0 %654
    %v657 = vlaneseq
    %v658 = vshrl.u32 %v657, 7
    %v659 = vsub.s32 0, %v658
    %v660 = vrot.slane %v655, %v659
    %vm661 = vcmask 80896
    %v663 = vsel %vm661, %v650, 0
    %v666 = vsel %vm661, %v646, 0
    %v669 = vsel %vm661, %v647, 0
    %v672 = vsel %vm661, %v648, 0
    %v675 = vsel %vm661, %v649, 0
    %677 = vmatprep.subr.mxu0 0.0
    %678 = vmatpush1.xpose.msra.mxu0 0.0
    %679 = vmatprep.subr.mxu0 0.0
    %680 = vmatpush1.xpose.msra.mxu0 0.0
    %681 = vmatprep.subr.mxu0 0.0
    %682 = vmatpush1.xpose.msra.mxu0 0.0
    %683 = vmatprep.subr.mxu0 0.0
    %684 = vmatpush1.xpose.msra.mxu0 0.0
    %685 = vmatprep.subr.mxu0 0.0
    %686 = vmatpush1.xpose.msra.mxu0 0.0
    %687 = vmatprep.subr.mxu0 0.0
    %688 = vmatpush1.xpose.msra.mxu0 0.0
    %689 = vmatprep.subr.mxu0 0.0
    %690 = vmatpush1.xpose.msra.mxu0 0.0
    %691 = vmatprep.subr.mxu0 0.0
    %692 = vmatpush1.xpose.msra.mxu0 0.0
    %693 = vmatprep.subr.mxu0 0.0
    %694 = vmatpush1.xpose.msra.mxu0 0.0
    %695 = vmatprep.subr.mxu0 0.0
    %696 = vmatpush1.xpose.msra.mxu0 0.0
    %697 = vmatprep.subr.mxu0 0.0
    %698 = vmatpush1.xpose.msra.mxu0 0.0
    %699 = vmatprep.subr.mxu0 0.0
    %700 = vmatpush1.xpose.msra.mxu0 0.0
    %701 = vmatprep.subr.mxu0 0.0
    %702 = vmatpush1.xpose.msra.mxu0 %v675
    %703 = vmatprep.subr.mxu0 0.0
    %704 = vmatpush1.xpose.msra.mxu0 %v672
    %705 = vmatprep.subr.mxu0 0.0
    %706 = vmatpush1.xpose.msra.mxu0 %v669
    %707 = vmatprep.subr.mxu0 0.0
    %708 = vmatpush1.xpose.msra.mxu0 %v666
    %709 = vmatprep.subr.mxu0 0.0
    %710 = vmatpush2.xpose.msra.mxu0 0.0
    %711 = vmatprep.subr.mxu0 0.0
    %712 = vmatpush2.xpose.msra.mxu0 0.0
    %713 = vmatprep.subr.mxu0 0.0
    %714 = vmatpush2.xpose.msra.mxu0 0.0
    %715 = vmatprep.subr.mxu0 0.0
    %716 = vmatpush2.xpose.msra.mxu0 0.0
    %717 = vmatprep.subr.mxu0 0.0
    %718 = vmatpush2.xpose.msra.mxu0 0.0
    %719 = vmatprep.subr.mxu0 0.0
    %720 = vmatpush2.xpose.msra.mxu0 0.0
    %721 = vmatprep.subr.mxu0 0.0
    %722 = vmatpush2.xpose.msra.mxu0 0.0
    %723 = vmatprep.subr.mxu0 0.0
    %724 = vmatpush2.xpose.msra.mxu0 0.0
    %725 = vmatprep.subr.mxu0 0.0
    %726 = vmatpush2.xpose.msra.mxu0 0.0
    %727 = vmatprep.subr.mxu0 0.0
    %728 = vmatpush2.xpose.msra.mxu0 0.0
    %729 = vmatprep.subr.mxu0 0.0
    %730 = vmatpush2.xpose.msra.mxu0 0.0
    %731 = vmatprep.subr.mxu0 0.0
    %732 = vmatpush2.xpose.msra.mxu0 0.0
    %733 = vmatprep.subr.mxu0 0.0
    %734 = vmatpush2.xpose.msra.mxu0 0.0
    %735 = vmatprep.subr.mxu0 0.0
    %736 = vmatpush2.xpose.msra.mxu0 0.0
    %737 = vmatprep.subr.mxu0 0.0
    %738 = vmatpush2.xpose.msra.mxu0 0.0
    %739 = vmatprep.subr.mxu0 0.0
    %740 = vmatpush2.xpose.msra.mxu0 0.0
    %741 = vmatprep.mubr.f32.mxu0 0.0
    %742 = vmatmul.mubr.f32.gmra.mxu0 %v663
    %v743 = vpop.f32.mrf.mxu0
    %v744 = vadd.f32 %v660, %v743
    %v745 = vpop.f32.mrf.mxu0
    %746 = vdwg.mxu0
    %v747 = vmax.f32 %v744, 0.0
    %vm748 = vcmask 253952
    %749 = vst.msk [vmem:[#allocation10] sm:$0x1] %vm748, %v747
    // Predicated region
    $region42: #{tpu_custom_call.1} parent=1 // pred_check
      _
    $region43: #{tpu_custom_call.1} parent=1 // pred_check_branch
      %751 = sbr.rel (0) target = $region45
    $region44: #{tpu_custom_call.1} parent=1 // pred_region
      %s753 = ssub.s32 16, 16
      %754 = vsyncadd [#allocation7], %s753
      %s756 = sshll.u32 [#allocation10], 4
      %s757 = int_to_ptr.vmem [resolvable:$true] %s756
      %759 = dma.vmem_to_hbm [thread:$0]  %s757, 16, %s8, [#allocation7]
    $region45: #{tpu_custom_call.1} parent=1 // pred_fallthru
      _
    // Predicated region
    $region46: #{tpu_custom_call.1} parent=1 // pred_check
      _
    $region47: #{tpu_custom_call.1} parent=1 // pred_check_branch
      %761 = sbr.rel (0) target = $region49
    $region48: #{tpu_custom_call.1} parent=1 // pred_region
      %762 = dma.done [#allocation7], 16
    $region49: #{tpu_custom_call.1} parent=1 // pred_fallthru
      _
    %763 = vsyncpa [#allocation6], 1
    %764 = vsyncpa [#allocation9], 1
    %765 = vsyncpa [#allocation7], 1

</llo_original>
